<compile_context>
chip_gen: v7x
topology: tpu7x:2x2x1
jax: 0.10.0
libtpu: 0.0.40
codegen_flags: <defaults>
</compile_context>

<pallas_src>
import functools

import jax
import jax.numpy as jnp
import numpy as np
from jax import lax
from jax.experimental import pallas as pl
from jax.experimental.pallas import tpu as pltpu


def _round_up(x, m):
    return (x + m - 1) // m * m


def _nce_kernel(x1r_ref, x2r_ref, x1c_ref, x2c_ref, out_ref,
                m1_ref, l1_ref, m2_ref, l2_ref,
                *, temperature, batch, tm, tn):
    i = pl.program_id(0)
    j = pl.program_id(1)
    nj = pl.num_programs(1)

    # ---- init running-softmax state at the first column block -------------
    @pl.when(j == 0)
    def _():
        m1_ref[...] = jnp.full_like(m1_ref, -jnp.inf)
        l1_ref[...] = jnp.zeros_like(l1_ref)
        m2_ref[...] = jnp.full_like(m2_ref, -jnp.inf)
        l2_ref[...] = jnp.zeros_like(l2_ref)

    x1r = x1r_ref[...]          # (tm, H)  row block of x1
    x2r = x2r_ref[...]          # (tm, H)  row block of x2
    x1c = x1c_ref[...]          # (tn, H)  column block of x1
    x2c = x2c_ref[...]          # (tn, H)  column block of x2

    # Fold 1/temperature into the LHS once: (x/t) @ y^T == (x @ y^T)/t.
    inv_t = jnp.asarray(1.0 / temperature, dtype=x1r.dtype)
    x1r_s = x1r * inv_t
    x2r_s = x2r * inv_t

    # X @ Y^T as a dim-1 x dim-1 contraction (no XLU transposes); native
    # operand dtype, f32 accumulation on the MXU.
    dn = (((1,), (1,)), ((), ()))
    s12 = lax.dot_general(x1r_s, x2c, dn, preferred_element_type=jnp.float32)
    s11 = lax.dot_general(x1r_s, x1c, dn, preferred_element_type=jnp.float32)
    s22 = lax.dot_general(x2r_s, x2c, dn, preferred_element_type=jnp.float32)
    s21 = lax.dot_general(x2r_s, x1c, dn, preferred_element_type=jnp.float32)  # == sim12^T block

    # Masks: padded columns excluded everywhere; diagonal excluded from the
    # self-similarity blocks (sim11 / sim22), as in the PyTorch module.
    row_ids = i * tm + lax.broadcasted_iota(jnp.int32, (tm, tn), 0)
    col_ids = j * tn + lax.broadcasted_iota(jnp.int32, (tm, tn), 1)
    col_ok = col_ids < batch
    off_diag = row_ids != col_ids
    neg_inf = jnp.float32(-jnp.inf)

    s12 = jnp.where(col_ok, s12, neg_inf)
    s21 = jnp.where(col_ok, s21, neg_inf)
    s11 = jnp.where(col_ok & off_diag, s11, neg_inf)
    s22 = jnp.where(col_ok & off_diag, s22, neg_inf)

    def online_update(m_ref, l_ref, a, b):
        # Online log-sum-exp over the virtual concatenation [a, b] along -1.
        m_blk = jnp.maximum(jnp.max(a, axis=-1, keepdims=True),
                            jnp.max(b, axis=-1, keepdims=True))
        m_new = jnp.maximum(m_ref[...], m_blk)
        alpha = jnp.exp(m_ref[...] - m_new)
        p = (jnp.sum(jnp.exp(a - m_new), axis=-1, keepdims=True)
             + jnp.sum(jnp.exp(b - m_new), axis=-1, keepdims=True))
        l_ref[...] = alpha * l_ref[...] + p
        m_ref[...] = m_new

    online_update(m1_ref, l1_ref, s12, s11)    # rows 0..B-1   : [sim12, sim11]
    online_update(m2_ref, l2_ref, s22, s21)    # rows B..2B-1  : [sim22, sim12^T]

    # ---- finalize on the last column block ---------------------------------
    @pl.when(j == nj - 1)
    def _():
        # target_i = sim12[i, i] = (x1_i . x2_i) / t, computed on the VPU
        # (no full-row select + XLU reduce needed).
        target = jnp.sum(x1r_s.astype(jnp.float32) * x2r.astype(jnp.float32),
                         axis=-1, keepdims=True)
        lse1 = m1_ref[...] + jnp.log(l1_ref[...])
        lse2 = m2_ref[...] + jnp.log(l2_ref[...])
        row_ok = (i * tm + lax.broadcasted_iota(jnp.int32, (tm, 1), 0)) < batch
        out_ref[...] = jnp.where(row_ok, lse1 + lse2 - 2.0 * target,
                                 jnp.float32(0.0))


def nce_loss_pallas(batch_sample_one, batch_sample_two, temperature):
    assert batch_sample_one.shape == batch_sample_two.shape
    B, H = batch_sample_one.shape
    dtype = batch_sample_one.dtype

    # Pad H to the lane width (128) and B up to the tile size.  Zero-padding
    # of H leaves all dot products unchanged; padded rows/cols are masked
    # inside the kernel.
    H_pad = _round_up(H, 128)
    tile = 256 if B > 256 else _round_up(B, 8)   # 256x256 f32 blocks are safe
    B_pad = _round_up(B, tile)                   # on v5e/v6e/v7x VMEM budgets

    def pad(x):
        return jnp.pad(x, ((0, B_pad - B), (0, H_pad - H)))

    x1 = pad(batch_sample_one)
    x2 = pad(batch_sample_two)

    n_i = B_pad // tile
    n_j = B_pad // tile

    kernel = functools.partial(_nce_kernel, temperature=float(temperature),
                               batch=B, tm=tile, tn=tile)

    # VMEM budget: double-buffered input blocks + sim blocks/exp temporaries.
    itemsize = jnp.dtype(dtype).itemsize
    vmem_need = (4 * 2 * tile * H_pad * itemsize      # 4 inputs, double-buffered
                 + 6 * tile * tile * 4                # sim blocks + exp temps
                 + 2 * 2 * tile * 4                   # output block
                 + 4 * tile * 4)                      # scratch accumulators
    vmem_limit = int(min(max(2 * vmem_need, 32 * 1024 * 1024),
                         48 * 1024 * 1024))           # safe on v7x's 64 MiB
    # TODO(synk): for very large hidden sizes (H_pad >~ 4K) also chunk H.

    per_row = pl.pallas_call(
        kernel,
        out_shape=jax.ShapeDtypeStruct((B_pad, 1), jnp.float32),
        grid_spec=pltpu.PrefetchScalarGridSpec(
            num_scalar_prefetch=0,
            grid=(n_i, n_j),
            in_specs=[
                pl.BlockSpec((tile, H_pad), lambda i, j: (i, 0)),  # x1 row blk
                pl.BlockSpec((tile, H_pad), lambda i, j: (i, 0)),  # x2 row blk
                pl.BlockSpec((tile, H_pad), lambda i, j: (j, 0)),  # x1 col blk
                pl.BlockSpec((tile, H_pad), lambda i, j: (j, 0)),  # x2 col blk
            ],
            out_specs=pl.BlockSpec((tile, 1), lambda i, j: (i, 0)),
            scratch_shapes=[pltpu.VMEM((tile, 1), jnp.float32)
                            for _ in range(4)],
        ),
        compiler_params=pltpu.CompilerParams(
            dimension_semantics=("parallel", "arbitrary"),
            vmem_limit_bytes=vmem_limit,
        ),
    )(x1, x2, x1, x2)

    # Mean over the 2B rows of the (2B, 2B) logits matrix.
    return jnp.sum(per_row) / jnp.float32(2 * B)


def nce_loss_reference(x1, x2, temperature):
    # Pure-JAX reference mirroring the PyTorch forward exactly.
    x1 = x1.astype(jnp.float32)
    x2 = x2.astype(jnp.float32)
    sim11 = x1 @ x1.T / temperature
    sim22 = x2 @ x2.T / temperature
    sim12 = x1 @ x2.T / temperature
    d = sim12.shape[-1]
    eye = jnp.eye(d, dtype=bool)
    sim11 = jnp.where(eye, -jnp.inf, sim11)
    sim22 = jnp.where(eye, -jnp.inf, sim22)
    raw1 = jnp.concatenate([sim12, sim11], axis=-1)
    raw2 = jnp.concatenate([sim22, sim12.T], axis=-1)
    logits = jnp.concatenate([raw1, raw2], axis=-2)          # (2d, 2d)
    labels = jnp.arange(2 * d)
    lse = jax.scipy.special.logsumexp(logits, axis=-1)
    correct = logits[jnp.arange(2 * d), labels]
    return jnp.mean(lse - correct)


if __name__ == "__main__":
    B, H = 8, 32
    temperature = 0.5

    key = jax.random.PRNGKey(0)
    k1, k2 = jax.random.split(key)
    batch_sample_one = jax.random.normal(k1, (B, H), dtype=jnp.float32)
    batch_sample_two = jax.random.normal(k2, (B, H), dtype=jnp.float32)

    loss = nce_loss_pallas(batch_sample_one, batch_sample_two, temperature)
    loss = jax.block_until_ready(loss)

    ref = nce_loss_reference(batch_sample_one, batch_sample_two, temperature)
    np.testing.assert_allclose(np.asarray(loss), np.asarray(ref),
                               rtol=1e-5, atol=1e-5)

    print("KERNEL_OK")
</pallas_src>

<mosaic_0001>
module attributes {stable_mosaic.version = 11 : i64} {
  func.func @_nce_kernel(%arg0: i32, %arg1: i32, %arg2: memref<8x128xf32, #tpu.memory_space<vmem>>, %arg3: memref<8x128xf32, #tpu.memory_space<vmem>>, %arg4: memref<8x128xf32, #tpu.memory_space<vmem>>, %arg5: memref<8x128xf32, #tpu.memory_space<vmem>>, %arg6: memref<8x1xf32, #tpu.memory_space<vmem>>, %arg7: memref<8x1xf32, #tpu.memory_space<vmem>>, %arg8: memref<8x1xf32, #tpu.memory_space<vmem>>, %arg9: memref<8x1xf32, #tpu.memory_space<vmem>>, %arg10: memref<8x1xf32, #tpu.memory_space<vmem>>) attributes {dimension_semantics = [#tpu.dimension_semantics<parallel>, #tpu.dimension_semantics<arbitrary>], iteration_bounds = array<i64: 1, 1>, scalar_prefetch = 0 : i64, scratch_operands = 4 : i64, tpu.core_type = #tpu.core_type<tc>, window_params = [{transform_indices = @transform_0, window_bounds = array<i64: 8, 128>}, {transform_indices = @transform_1, window_bounds = array<i64: 8, 128>}, {transform_indices = @transform_2, window_bounds = array<i64: 8, 128>}, {transform_indices = @transform_3, window_bounds = array<i64: 8, 128>}, {transform_indices = @transform_4, window_bounds = array<i64: 8, 1>}]} {
    %c0_i32 = arith.constant 0 : i32
    %0 = arith.cmpi eq, %arg1, %c0_i32 : i32
    %1 = arith.extui %0 : i1 to i32
    %c0_i32_0 = arith.constant 0 : i32
    %2 = arith.cmpi ne, %1, %c0_i32_0 : i32
    scf.if %2 {
      %cst_49 = arith.constant 0xFF800000 : f32
      %91 = vector.broadcast %cst_49 : f32 to vector<8x1xf32>
      %c0_50 = arith.constant 0 : index
      %c0_51 = arith.constant 0 : index
      %92 = vector.load %arg7[%c0_50, %c0_51] : memref<8x1xf32, #tpu.memory_space<vmem>>, vector<8x1xf32>
      tpu.vector_store %arg7[%c0_50, %c0_51], %91 {strides = array<i32>} : memref<8x1xf32, #tpu.memory_space<vmem>>, vector<8x1xf32>,
      %cst_52 = arith.constant 0.000000e+00 : f32
      %93 = vector.broadcast %cst_52 : f32 to vector<8x1xf32>
      %c0_53 = arith.constant 0 : index
      %c0_54 = arith.constant 0 : index
      %94 = vector.load %arg8[%c0_53, %c0_54] : memref<8x1xf32, #tpu.memory_space<vmem>>, vector<8x1xf32>
      tpu.vector_store %arg8[%c0_53, %c0_54], %93 {strides = array<i32>} : memref<8x1xf32, #tpu.memory_space<vmem>>, vector<8x1xf32>,
      %cst_55 = arith.constant 0xFF800000 : f32
      %95 = vector.broadcast %cst_55 : f32 to vector<8x1xf32>
      %c0_56 = arith.constant 0 : index
      %c0_57 = arith.constant 0 : index
      %96 = vector.load %arg9[%c0_56, %c0_57] : memref<8x1xf32, #tpu.memory_space<vmem>>, vector<8x1xf32>
      tpu.vector_store %arg9[%c0_56, %c0_57], %95 {strides = array<i32>} : memref<8x1xf32, #tpu.memory_space<vmem>>, vector<8x1xf32>,
      %cst_58 = arith.constant 0.000000e+00 : f32
      %97 = vector.broadcast %cst_58 : f32 to vector<8x1xf32>
      %c0_59 = arith.constant 0 : index
      %c0_60 = arith.constant 0 : index
      %98 = vector.load %arg10[%c0_59, %c0_60] : memref<8x1xf32, #tpu.memory_space<vmem>>, vector<8x1xf32>
      tpu.vector_store %arg10[%c0_59, %c0_60], %97 {strides = array<i32>} : memref<8x1xf32, #tpu.memory_space<vmem>>, vector<8x1xf32>,
    } else {
    }
    %c0 = arith.constant 0 : index
    %c0_1 = arith.constant 0 : index
    %3 = vector.load %arg2[%c0, %c0_1] : memref<8x128xf32, #tpu.memory_space<vmem>>, vector<8x128xf32>
    %c0_2 = arith.constant 0 : index
    %c0_3 = arith.constant 0 : index
    %4 = vector.load %arg3[%c0_2, %c0_3] : memref<8x128xf32, #tpu.memory_space<vmem>>, vector<8x128xf32>
    %c0_4 = arith.constant 0 : index
    %c0_5 = arith.constant 0 : index
    %5 = vector.load %arg4[%c0_4, %c0_5] : memref<8x128xf32, #tpu.memory_space<vmem>>, vector<8x128xf32>
    %c0_6 = arith.constant 0 : index
    %c0_7 = arith.constant 0 : index
    %6 = vector.load %arg5[%c0_6, %c0_7] : memref<8x128xf32, #tpu.memory_space<vmem>>, vector<8x128xf32>
    %cst = arith.constant 2.000000e+00 : f32
    %7 = vector.broadcast %cst : f32 to vector<8x128xf32>
    %8 = arith.mulf %3, %7 : vector<8x128xf32>
    %cst_8 = arith.constant 2.000000e+00 : f32
    %9 = vector.broadcast %cst_8 : f32 to vector<8x128xf32>
    %10 = arith.mulf %4, %9 : vector<8x128xf32>
    %cst_9 = arith.constant dense<0.000000e+00> : vector<8x8xf32>
    %11 = tpu.matmul %8, %6, %cst_9 {dimension_numbers = #tpu.dot_dimension_numbers<[1], [1], [0], [0], [0, 0, 1, 0], [], []>} : vector<8x128xf32>, vector<8x128xf32>, vector<8x8xf32> -> vector<8x8xf32>
    %cst_10 = arith.constant dense<0.000000e+00> : vector<8x8xf32>
    %12 = tpu.matmul %8, %5, %cst_10 {dimension_numbers = #tpu.dot_dimension_numbers<[1], [1], [0], [0], [0, 0, 1, 0], [], []>} : vector<8x128xf32>, vector<8x128xf32>, vector<8x8xf32> -> vector<8x8xf32>
    %cst_11 = arith.constant dense<0.000000e+00> : vector<8x8xf32>
    %13 = tpu.matmul %10, %6, %cst_11 {dimension_numbers = #tpu.dot_dimension_numbers<[1], [1], [0], [0], [0, 0, 1, 0], [], []>} : vector<8x128xf32>, vector<8x128xf32>, vector<8x8xf32> -> vector<8x8xf32>
    %cst_12 = arith.constant dense<0.000000e+00> : vector<8x8xf32>
    %14 = tpu.matmul %10, %5, %cst_12 {dimension_numbers = #tpu.dot_dimension_numbers<[1], [1], [0], [0], [0, 0, 1, 0], [], []>} : vector<8x128xf32>, vector<8x128xf32>, vector<8x8xf32> -> vector<8x8xf32>
    %c8_i32 = arith.constant 8 : i32
    %15 = arith.muli %arg0, %c8_i32 : i32
    %16 = tpu.iota {dimensions = array<i32: 0>} : vector<8x8xi32>
    %17 = vector.broadcast %15 : i32 to vector<8x8xi32>
    %18 = arith.addi %17, %16 : vector<8x8xi32>
    %c8_i32_13 = arith.constant 8 : i32
    %19 = arith.muli %arg1, %c8_i32_13 : i32
    %20 = tpu.iota {dimensions = array<i32: 1>} : vector<8x8xi32>
    %21 = vector.broadcast %19 : i32 to vector<8x8xi32>
    %22 = arith.addi %21, %20 : vector<8x8xi32>
    %c8_i32_14 = arith.constant 8 : i32
    %23 = vector.broadcast %c8_i32_14 : i32 to vector<8x8xi32>
    %24 = arith.cmpi slt, %22, %23 : vector<8x8xi32>
    %25 = arith.cmpi ne, %18, %22 : vector<8x8xi32>
    %cst_15 = arith.constant 0xFF800000 : f32
    %26 = vector.broadcast %cst_15 : f32 to vector<8x8xf32>
    %27 = arith.select %24, %11, %26 : vector<8x8xi1>, vector<8x8xf32>
    %cst_16 = arith.constant 0xFF800000 : f32
    %28 = vector.broadcast %cst_16 : f32 to vector<8x8xf32>
    %29 = arith.select %24, %14, %28 : vector<8x8xi1>, vector<8x8xf32>
    %30 = arith.andi %24, %25 : vector<8x8xi1>
    %cst_17 = arith.constant 0xFF800000 : f32
    %31 = vector.broadcast %cst_17 : f32 to vector<8x8xf32>
    %32 = arith.select %30, %12, %31 : vector<8x8xi1>, vector<8x8xf32>
    %33 = arith.andi %24, %25 : vector<8x8xi1>
    %cst_18 = arith.constant 0xFF800000 : f32
    %34 = vector.broadcast %cst_18 : f32 to vector<8x8xf32>
    %35 = arith.select %33, %13, %34 : vector<8x8xi1>, vector<8x8xf32>
    %cst_19 = arith.constant dense<0xFF800000> : vector<8xf32>
    %36 = vector.multi_reduction <maximumf>, %27, %cst_19 [1] : vector<8x8xf32> to vector<8xf32>
    %37 = vector.shape_cast %36 : vector<8xf32> to vector<8x1xf32>
    %cst_20 = arith.constant dense<0xFF800000> : vector<8xf32>
    %38 = vector.multi_reduction <maximumf>, %32, %cst_20 [1] : vector<8x8xf32> to vector<8xf32>
    %39 = vector.shape_cast %38 : vector<8xf32> to vector<8x1xf32>
    %40 = arith.maximumf %37, %39 : vector<8x1xf32>
    %c0_21 = arith.constant 0 : index
    %c0_22 = arith.constant 0 : index
    %41 = vector.load %arg7[%c0_21, %c0_22] : memref<8x1xf32, #tpu.memory_space<vmem>>, vector<8x1xf32>
    %42 = arith.maximumf %41, %40 : vector<8x1xf32>
    %c0_23 = arith.constant 0 : index
    %c0_24 = arith.constant 0 : index
    %43 = vector.load %arg7[%c0_23, %c0_24] : memref<8x1xf32, #tpu.memory_space<vmem>>, vector<8x1xf32>
    %44 = arith.subf %43, %42 : vector<8x1xf32>
    %45 = math.exp %44 : vector<8x1xf32>
    %46 = vector.broadcast %42 : vector<8x1xf32> to vector<8x8xf32>
    %47 = arith.subf %27, %46 : vector<8x8xf32>
    %48 = math.exp %47 : vector<8x8xf32>
    %cst_25 = arith.constant dense<0.000000e+00> : vector<8xf32>
    %49 = vector.multi_reduction <add>, %48, %cst_25 [1] : vector<8x8xf32> to vector<8xf32>
    %50 = vector.shape_cast %49 : vector<8xf32> to vector<8x1xf32>
    %51 = vector.broadcast %42 : vector<8x1xf32> to vector<8x8xf32>
    %52 = arith.subf %32, %51 : vector<8x8xf32>
    %53 = math.exp %52 : vector<8x8xf32>
    %cst_26 = arith.constant dense<0.000000e+00> : vector<8xf32>
    %54 = vector.multi_reduction <add>, %53, %cst_26 [1] : vector<8x8xf32> to vector<8xf32>
    %55 = vector.shape_cast %54 : vector<8xf32> to vector<8x1xf32>
    %56 = arith.addf %50, %55 : vector<8x1xf32>
    %c0_27 = arith.constant 0 : index
    %c0_28 = arith.constant 0 : index
    %57 = vector.load %arg8[%c0_27, %c0_28] : memref<8x1xf32, #tpu.memory_space<vmem>>, vector<8x1xf32>
    %58 = arith.mulf %45, %57 : vector<8x1xf32>
    %59 = arith.addf %58, %56 : vector<8x1xf32>
    %c0_29 = arith.constant 0 : index
    %c0_30 = arith.constant 0 : index
    %60 = vector.load %arg8[%c0_29, %c0_30] : memref<8x1xf32, #tpu.memory_space<vmem>>, vector<8x1xf32>
    tpu.vector_store %arg8[%c0_29, %c0_30], %59 {strides = array<i32>} : memref<8x1xf32, #tpu.memory_space<vmem>>, vector<8x1xf32>,
    %c0_31 = arith.constant 0 : index
    %c0_32 = arith.constant 0 : index
    %61 = vector.load %arg7[%c0_31, %c0_32] : memref<8x1xf32, #tpu.memory_space<vmem>>, vector<8x1xf32>
    tpu.vector_store %arg7[%c0_31, %c0_32], %42 {strides = array<i32>} : memref<8x1xf32, #tpu.memory_space<vmem>>, vector<8x1xf32>,
    %cst_33 = arith.constant dense<0xFF800000> : vector<8xf32>
    %62 = vector.multi_reduction <maximumf>, %35, %cst_33 [1] : vector<8x8xf32> to vector<8xf32>
    %63 = vector.shape_cast %62 : vector<8xf32> to vector<8x1xf32>
    %cst_34 = arith.constant dense<0xFF800000> : vector<8xf32>
    %64 = vector.multi_reduction <maximumf>, %29, %cst_34 [1] : vector<8x8xf32> to vector<8xf32>
    %65 = vector.shape_cast %64 : vector<8xf32> to vector<8x1xf32>
    %66 = arith.maximumf %63, %65 : vector<8x1xf32>
    %c0_35 = arith.constant 0 : index
    %c0_36 = arith.constant 0 : index
    %67 = vector.load %arg9[%c0_35, %c0_36] : memref<8x1xf32, #tpu.memory_space<vmem>>, vector<8x1xf32>
    %68 = arith.maximumf %67, %66 : vector<8x1xf32>
    %c0_37 = arith.constant 0 : index
    %c0_38 = arith.constant 0 : index
    %69 = vector.load %arg9[%c0_37, %c0_38] : memref<8x1xf32, #tpu.memory_space<vmem>>, vector<8x1xf32>
    %70 = arith.subf %69, %68 : vector<8x1xf32>
    %71 = math.exp %70 : vector<8x1xf32>
    %72 = vector.broadcast %68 : vector<8x1xf32> to vector<8x8xf32>
    %73 = arith.subf %35, %72 : vector<8x8xf32>
    %74 = math.exp %73 : vector<8x8xf32>
    %cst_39 = arith.constant dense<0.000000e+00> : vector<8xf32>
    %75 = vector.multi_reduction <add>, %74, %cst_39 [1] : vector<8x8xf32> to vector<8xf32>
    %76 = vector.shape_cast %75 : vector<8xf32> to vector<8x1xf32>
    %77 = vector.broadcast %68 : vector<8x1xf32> to vector<8x8xf32>
    %78 = arith.subf %29, %77 : vector<8x8xf32>
    %79 = math.exp %78 : vector<8x8xf32>
    %cst_40 = arith.constant dense<0.000000e+00> : vector<8xf32>
    %80 = vector.multi_reduction <add>, %79, %cst_40 [1] : vector<8x8xf32> to vector<8xf32>
    %81 = vector.shape_cast %80 : vector<8xf32> to vector<8x1xf32>
    %82 = arith.addf %76, %81 : vector<8x1xf32>
    %c0_41 = arith.constant 0 : index
    %c0_42 = arith.constant 0 : index
    %83 = vector.load %arg10[%c0_41, %c0_42] : memref<8x1xf32, #tpu.memory_space<vmem>>, vector<8x1xf32>
    %84 = arith.mulf %71, %83 : vector<8x1xf32>
    %85 = arith.addf %84, %82 : vector<8x1xf32>
    %c0_43 = arith.constant 0 : index
    %c0_44 = arith.constant 0 : index
    %86 = vector.load %arg10[%c0_43, %c0_44] : memref<8x1xf32, #tpu.memory_space<vmem>>, vector<8x1xf32>
    tpu.vector_store %arg10[%c0_43, %c0_44], %85 {strides = array<i32>} : memref<8x1xf32, #tpu.memory_space<vmem>>, vector<8x1xf32>,
    %c0_45 = arith.constant 0 : index
    %c0_46 = arith.constant 0 : index
    %87 = vector.load %arg9[%c0_45, %c0_46] : memref<8x1xf32, #tpu.memory_space<vmem>>, vector<8x1xf32>
    tpu.vector_store %arg9[%c0_45, %c0_46], %68 {strides = array<i32>} : memref<8x1xf32, #tpu.memory_space<vmem>>, vector<8x1xf32>,
    %c0_i32_47 = arith.constant 0 : i32
    %88 = arith.cmpi eq, %arg1, %c0_i32_47 : i32
    %89 = arith.extui %88 : i1 to i32
    %c0_i32_48 = arith.constant 0 : i32
    %90 = arith.cmpi ne, %89, %c0_i32_48 : i32
    scf.if %90 {
      %91 = arith.mulf %8, %4 : vector<8x128xf32>
      %cst_49 = arith.constant dense<0.000000e+00> : vector<8xf32>
      %92 = vector.multi_reduction <add>, %91, %cst_49 [1] : vector<8x128xf32> to vector<8xf32>
      %93 = vector.shape_cast %92 : vector<8xf32> to vector<8x1xf32>
      %c0_50 = arith.constant 0 : index
      %c0_51 = arith.constant 0 : index
      %94 = vector.load %arg7[%c0_50, %c0_51] : memref<8x1xf32, #tpu.memory_space<vmem>>, vector<8x1xf32>
      %c0_52 = arith.constant 0 : index
      %c0_53 = arith.constant 0 : index
      %95 = vector.load %arg8[%c0_52, %c0_53] : memref<8x1xf32, #tpu.memory_space<vmem>>, vector<8x1xf32>
      %96 = math.log %95 : vector<8x1xf32>
      %97 = arith.addf %94, %96 : vector<8x1xf32>
      %c0_54 = arith.constant 0 : index
      %c0_55 = arith.constant 0 : index
      %98 = vector.load %arg9[%c0_54, %c0_55] : memref<8x1xf32, #tpu.memory_space<vmem>>, vector<8x1xf32>
      %c0_56 = arith.constant 0 : index
      %c0_57 = arith.constant 0 : index
      %99 = vector.load %arg10[%c0_56, %c0_57] : memref<8x1xf32, #tpu.memory_space<vmem>>, vector<8x1xf32>
      %100 = math.log %99 : vector<8x1xf32>
      %101 = arith.addf %98, %100 : vector<8x1xf32>
      %c8_i32_58 = arith.constant 8 : i32
      %102 = arith.muli %arg0, %c8_i32_58 : i32
      %103 = tpu.iota {dimensions = array<i32: 0>} : vector<8x1xi32>
      %104 = vector.broadcast %102 : i32 to vector<8x1xi32>
      %105 = arith.addi %104, %103 : vector<8x1xi32>
      %c8_i32_59 = arith.constant 8 : i32
      %106 = vector.broadcast %c8_i32_59 : i32 to vector<8x1xi32>
      %107 = arith.cmpi slt, %105, %106 : vector<8x1xi32>
      %108 = arith.addf %97, %101 : vector<8x1xf32>
      %cst_60 = arith.constant 2.000000e+00 : f32
      %109 = vector.broadcast %cst_60 : f32 to vector<8x1xf32>
      %110 = arith.mulf %109, %93 : vector<8x1xf32>
      %111 = arith.subf %108, %110 : vector<8x1xf32>
      %cst_61 = arith.constant 0.000000e+00 : f32
      %112 = vector.broadcast %cst_61 : f32 to vector<8x1xf32>
      %113 = arith.select %107, %111, %112 : vector<8x1xi1>, vector<8x1xf32>
      %c0_62 = arith.constant 0 : index
      %c0_63 = arith.constant 0 : index
      %114 = vector.load %arg6[%c0_62, %c0_63] : memref<8x1xf32, #tpu.memory_space<vmem>>, vector<8x1xf32>
      tpu.vector_store %arg6[%c0_62, %c0_63], %113 {strides = array<i32>} : memref<8x1xf32, #tpu.memory_space<vmem>>, vector<8x1xf32>,
    } else {
    }
    return
  }
  func.func @transform_0(%arg0: i32, %arg1: i32) -> (i32, i32) {
    %c0_i32 = arith.constant 0 : i32
    %c0_i32_0 = arith.constant 0 : i32
    return %arg0, %c0_i32 : i32, i32
  }
  func.func @transform_1(%arg0: i32, %arg1: i32) -> (i32, i32) {
    %c0_i32 = arith.constant 0 : i32
    %c0_i32_0 = arith.constant 0 : i32
    return %arg0, %c0_i32 : i32, i32
  }
  func.func @transform_2(%arg0: i32, %arg1: i32) -> (i32, i32) {
    %c0_i32 = arith.constant 0 : i32
    %c0_i32_0 = arith.constant 0 : i32
    return %arg1, %c0_i32 : i32, i32
  }
  func.func @transform_3(%arg0: i32, %arg1: i32) -> (i32, i32) {
    %c0_i32 = arith.constant 0 : i32
    %c0_i32_0 = arith.constant 0 : i32
    return %arg1, %c0_i32 : i32, i32
  }
  func.func @transform_4(%arg0: i32, %arg1: i32) -> (i32, i32) {
    %c0_i32 = arith.constant 0 : i32
    %c0_i32_0 = arith.constant 0 : i32
    return %arg0, %c0_i32 : i32, i32
  }
}

</mosaic_0001>

<llo_original>
// kernel: tpu_custom_call.1
$region0: #{tpu_custom_call.1}
  #allocation0 [shape = 'u32[]', space=smem, size = 0x4, offset = 0x4, fixed_abs, tag = 'smem constant byte address 0x4 - core index']
  #allocation1 [shape = 'u32[144,128]{1,0:T(1,128)}', space=vmem, size = 0x12000, scoped, tag = 'internal scratch']
  #allocation2 [shape = 'f32[8,1]{1,0:T(8,128)}', space=vmem, size = 0x1000, scoped, tag = 'scratch operand']
  #allocation3 [shape = 'f32[8,1]{1,0:T(8,128)}', space=vmem, size = 0x1000, scoped, tag = 'scratch operand']
  #allocation4 [shape = 'f32[8,1]{1,0:T(8,128)}', space=vmem, size = 0x1000, scoped, tag = 'scratch operand']
  #allocation5 [shape = 'f32[8,1]{1,0:T(8,128)}', space=vmem, size = 0x1000, scoped, tag = 'scratch operand']
  %s0 = inlined_call_operand.hbm [shape: f32[8,128], index: 0, kind: input, shape index: {}]
  %s1 = inlined_call_operand.hbm [shape: f32[8,128], index: 1, kind: input, shape index: {}]
  %s2 = inlined_call_operand.hbm [shape: f32[8,128], index: 2, kind: input, shape index: {}]
  %s3 = inlined_call_operand.vmem [shape: f32[8,128], index: 3, kind: input, shape index: {}]
  %s4 = inlined_call_operand.vmem [shape: f32[8,1], index: 4, kind: output, shape index: {}]
  %s5 = sld [smem:[#allocation0]]
  $region46: #{tpu_custom_call.1} parent=0
    _
  %s7 = ssub.s32 1, %s5
  %s8 = scalar_select 0, %s7, %s5
  $region1: #{tpu_custom_call.1} parent=0
    #allocation6 [shape = 'u8[4096]{0}', space=vmem, size = 0x1000, scoped, tag = 'input window, operand 0, single buffered']
    #allocation7 [shape = 's32[1]{0}', space=sflag, size = 0x4, scoped, tag = 'scoped memory for tpu_custom_call.1']
    #allocation8 [shape = 'u8[4096]{0}', space=vmem, size = 0x1000, scoped, tag = 'input window, operand 1, single buffered']
    #allocation9 [shape = 's32[1]{0}', space=sflag, size = 0x4, scoped, tag = 'scoped memory for tpu_custom_call.1']
    #allocation10 [shape = 'u8[4096]{0}', space=vmem, size = 0x1000, scoped, tag = 'input window, operand 2, single buffered']
    %9 = vsyncpa [#allocation7], 0
    %10 = vsyncpa [#allocation9], 0
    // Predicated region
    $region2: #{tpu_custom_call.1} parent=1 // pred_check
      _
    $region3: #{tpu_custom_call.1} parent=1 // pred_check_branch
      %12 = sbr.rel (0) target = $region5
    $region4: #{tpu_custom_call.1} parent=1 // pred_region
      %s14 = ssub.s32 128, 128
      %15 = vsyncadd [#allocation7], %s14
      %s17 = sshll.u32 [#allocation6], 4
      %s18 = int_to_ptr.vmem [resolvable:$true] %s17
      %20 = dma.hbm_to_vmem [thread:$0]  %s0, 128, %s18, [#allocation7]
    $region5: #{tpu_custom_call.1} parent=1 // pred_fallthru
      _
    // Predicated region
    $region6: #{tpu_custom_call.1} parent=1 // pred_check
      _
    $region7: #{tpu_custom_call.1} parent=1 // pred_check_branch
      %22 = sbr.rel (0) target = $region9
    $region8: #{tpu_custom_call.1} parent=1 // pred_region
      %s24 = ssub.s32 128, 128
      %25 = vsyncadd [#allocation9], %s24
      %s27 = sshll.u32 [#allocation8], 4
      %s28 = int_to_ptr.vmem [resolvable:$true] %s27
      %30 = dma.hbm_to_vmem [thread:$0]  %s1, 128, %s28, [#allocation9]
    $region9: #{tpu_custom_call.1} parent=1 // pred_fallthru
      _
    // Predicated region
    $region10: #{tpu_custom_call.1} parent=1 // pred_check
      _
    $region11: #{tpu_custom_call.1} parent=1 // pred_check_branch
      %32 = sbr.rel (0) target = $region13
    $region12: #{tpu_custom_call.1} parent=1 // pred_region
      %s34 = ssub.s32 128, 128
      %35 = vsyncadd [#allocation9], %s34
      %s37 = sshll.u32 [#allocation10], 4
      %s38 = int_to_ptr.vmem [resolvable:$true] %s37
      %40 = dma.hbm_to_vmem [thread:$0]  %s2, 128, %s38, [#allocation9]
    $region13: #{tpu_custom_call.1} parent=1 // pred_fallthru
      _
    // Predicated region
    $region14: #{tpu_custom_call.1} parent=1 // pred_check
      _
    $region15: #{tpu_custom_call.1} parent=1 // pred_check_branch
      %42 = sbr.rel (0) target = $region17
    $region16: #{tpu_custom_call.1} parent=1 // pred_region
      _
    $region17: #{tpu_custom_call.1} parent=1 // pred_fallthru
      _
    // Predicated region
    $region18: #{tpu_custom_call.1} parent=1 // pred_check
      _
    $region19: #{tpu_custom_call.1} parent=1 // pred_check_branch
      %44 = sbr.rel (0) target = $region21
    $region20: #{tpu_custom_call.1} parent=1 // pred_region
      %45 = dma.done [#allocation7], 128
    $region21: #{tpu_custom_call.1} parent=1 // pred_fallthru
      _
    // Predicated region
    $region22: #{tpu_custom_call.1} parent=1 // pred_check
      _
    $region23: #{tpu_custom_call.1} parent=1 // pred_check_branch
      %47 = sbr.rel (0) target = $region25
    $region24: #{tpu_custom_call.1} parent=1 // pred_region
      %48 = dma.done [#allocation9], 128
    $region25: #{tpu_custom_call.1} parent=1 // pred_fallthru
      _
    // Predicated region
    $region26: #{tpu_custom_call.1} parent=1 // pred_check
      _
    $region27: #{tpu_custom_call.1} parent=1 // pred_check_branch
      %50 = sbr.rel (0) target = $region29
    $region28: #{tpu_custom_call.1} parent=1 // pred_region
      %51 = dma.done [#allocation9], 128
    $region29: #{tpu_custom_call.1} parent=1 // pred_fallthru
      _
    %p52 = scmp.eq.s32.totalorder 0, 0
    // Predicated region
    $region30: #{tpu_custom_call.1} parent=1 // pred_check
      %p53 = pneg %p52
    $region31: #{tpu_custom_call.1} parent=1 // pred_check_branch
      %55 = sbr.rel (%p53) target = $region33
    $region32: #{tpu_custom_call.1} parent=1 // pred_region
      %vm56 = vcmask 7168
      %57 = vst.msk [vmem:[#allocation2] sm:$0xff] %vm56, -inf
      %58 = vst.msk [vmem:[#allocation3] sm:$0xff] %vm56, 0.0
      %59 = vst.msk [vmem:[#allocation4] sm:$0xff] %vm56, -inf
      %60 = vst.msk [vmem:[#allocation5] sm:$0xff] %vm56, 0.0
    $region33: #{tpu_custom_call.1} parent=1 // pred_fallthru
      _
    %v61 = vld [vmem:[#allocation6] sm:$0xff]
    %v62 = vld [vmem:[#allocation8] sm:$0xff]
    %v63 = vld [vmem:[#allocation10] sm:$0xff]
    %v64 = vld [vmem:[%s3] sm:$0xff]
    %v65 = vmul.f32 %v61, 2.0
    %v66 = vmul.f32 %v62, 2.0
    %67 = vmatprep.subr.mxu0 0.0
    %68 = vmatpush1.xpose.msra.mxu0 %v64
    %69 = vmatprep.subr.mxu0 0.0
    %70 = vmatpush1.xpose.msra.mxu0 0.0
    %71 = vmatprep.subr.mxu0 0.0
    %72 = vmatpush1.xpose.msra.mxu0 0.0
    %73 = vmatprep.subr.mxu0 0.0
    %74 = vmatpush1.xpose.msra.mxu0 0.0
    %75 = vmatprep.subr.mxu0 0.0
    %76 = vmatpush1.xpose.msra.mxu0 0.0
    %77 = vmatprep.subr.mxu0 0.0
    %78 = vmatpush1.xpose.msra.mxu0 0.0
    %79 = vmatprep.subr.mxu0 0.0
    %80 = vmatpush1.xpose.msra.mxu0 0.0
    %81 = vmatprep.subr.mxu0 0.0
    %82 = vmatpush1.xpose.msra.mxu0 0.0
    %83 = vmatprep.subr.mxu0 0.0
    %84 = vmatpush1.xpose.msra.mxu0 0.0
    %85 = vmatprep.subr.mxu0 0.0
    %86 = vmatpush1.xpose.msra.mxu0 0.0
    %87 = vmatprep.subr.mxu0 0.0
    %88 = vmatpush1.xpose.msra.mxu0 0.0
    %89 = vmatprep.subr.mxu0 0.0
    %90 = vmatpush1.xpose.msra.mxu0 0.0
    %91 = vmatprep.subr.mxu0 0.0
    %92 = vmatpush1.xpose.msra.mxu0 0.0
    %93 = vmatprep.subr.mxu0 0.0
    %94 = vmatpush1.xpose.msra.mxu0 0.0
    %95 = vmatprep.subr.mxu0 0.0
    %96 = vmatpush1.xpose.msra.mxu0 0.0
    %97 = vmatprep.subr.mxu0 0.0
    %98 = vmatpush1.xpose.msra.mxu0 0.0
    %99 = vmatprep.subr.mxu0 0.0
    %100 = vmatpush1.xpose.msra.mxu0 0.0
    %101 = vmatprep.subr.mxu0 0.0
    %102 = vmatpush1.xpose.msra.mxu0 0.0
    %103 = vmatprep.subr.mxu0 0.0
    %104 = vmatpush1.xpose.msra.mxu0 0.0
    %105 = vmatprep.subr.mxu0 0.0
    %106 = vmatpush1.xpose.msra.mxu0 0.0
    %107 = vmatprep.subr.mxu0 0.0
    %108 = vmatpush1.xpose.msra.mxu0 0.0
    %109 = vmatprep.subr.mxu0 0.0
    %110 = vmatpush1.xpose.msra.mxu0 0.0
    %111 = vmatprep.subr.mxu0 0.0
    %112 = vmatpush1.xpose.msra.mxu0 0.0
    %113 = vmatprep.subr.mxu0 0.0
    %114 = vmatpush1.xpose.msra.mxu0 0.0
    %115 = vmatprep.subr.mxu0 0.0
    %116 = vmatpush1.xpose.msra.mxu0 0.0
    %117 = vmatprep.subr.mxu0 0.0
    %118 = vmatpush1.xpose.msra.mxu0 0.0
    %119 = vmatprep.subr.mxu0 0.0
    %120 = vmatpush1.xpose.msra.mxu0 0.0
    %121 = vmatprep.subr.mxu0 0.0
    %122 = vmatpush1.xpose.msra.mxu0 0.0
    %123 = vmatprep.subr.mxu0 0.0
    %124 = vmatpush1.xpose.msra.mxu0 0.0
    %125 = vmatprep.subr.mxu0 0.0
    %126 = vmatpush1.xpose.msra.mxu0 0.0
    %127 = vmatprep.subr.mxu0 0.0
    %128 = vmatpush1.xpose.msra.mxu0 0.0
    %129 = vmatprep.subr.mxu0 0.0
    %130 = vmatpush1.xpose.msra.mxu0 0.0
    %131 = vmatprep.mubr.f32.mxu0 0.0
    %132 = vmatmul.mubr.f32.gmra.mrb[0].mxu0 %v65
    %v133 = vpop.f32.mrb[0].mxu0
    %v134 = vadd.f32 0.0, %v133
    %v135 = vpop.f32.mrb[0].mxu0
    %136 = vdwg.mxu0
    %137 = vmatprep.subr.mxu0 0.0
    %138 = vmatpush1.xpose.msra.mxu0 %v63
    %139 = vmatprep.subr.mxu0 0.0
    %140 = vmatpush1.xpose.msra.mxu0 0.0
    %141 = vmatprep.subr.mxu0 0.0
    %142 = vmatpush1.xpose.msra.mxu0 0.0
    %143 = vmatprep.subr.mxu0 0.0
    %144 = vmatpush1.xpose.msra.mxu0 0.0
    %145 = vmatprep.subr.mxu0 0.0
    %146 = vmatpush1.xpose.msra.mxu0 0.0
    %147 = vmatprep.subr.mxu0 0.0
    %148 = vmatpush1.xpose.msra.mxu0 0.0
    %149 = vmatprep.subr.mxu0 0.0
    %150 = vmatpush1.xpose.msra.mxu0 0.0
    %151 = vmatprep.subr.mxu0 0.0
    %152 = vmatpush1.xpose.msra.mxu0 0.0
    %153 = vmatprep.subr.mxu0 0.0
    %154 = vmatpush1.xpose.msra.mxu0 0.0
    %155 = vmatprep.subr.mxu0 0.0
    %156 = vmatpush1.xpose.msra.mxu0 0.0
    %157 = vmatprep.subr.mxu0 0.0
    %158 = vmatpush1.xpose.msra.mxu0 0.0
    %159 = vmatprep.subr.mxu0 0.0
    %160 = vmatpush1.xpose.msra.mxu0 0.0
    %161 = vmatprep.subr.mxu0 0.0
    %162 = vmatpush1.xpose.msra.mxu0 0.0
    %163 = vmatprep.subr.mxu0 0.0
    %164 = vmatpush1.xpose.msra.mxu0 0.0
    %165 = vmatprep.subr.mxu0 0.0
    %166 = vmatpush1.xpose.msra.mxu0 0.0
    %167 = vmatprep.subr.mxu0 0.0
    %168 = vmatpush1.xpose.msra.mxu0 0.0
    %169 = vmatprep.subr.mxu0 0.0
    %170 = vmatpush1.xpose.msra.mxu0 0.0
    %171 = vmatprep.subr.mxu0 0.0
    %172 = vmatpush1.xpose.msra.mxu0 0.0
    %173 = vmatprep.subr.mxu0 0.0
    %174 = vmatpush1.xpose.msra.mxu0 0.0
    %175 = vmatprep.subr.mxu0 0.0
    %176 = vmatpush1.xpose.msra.mxu0 0.0
    %177 = vmatprep.subr.mxu0 0.0
    %178 = vmatpush1.xpose.msra.mxu0 0.0
    %179 = vmatprep.subr.mxu0 0.0
    %180 = vmatpush1.xpose.msra.mxu0 0.0
    %181 = vmatprep.subr.mxu0 0.0
    %182 = vmatpush1.xpose.msra.mxu0 0.0
    %183 = vmatprep.subr.mxu0 0.0
    %184 = vmatpush1.xpose.msra.mxu0 0.0
    %185 = vmatprep.subr.mxu0 0.0
    %186 = vmatpush1.xpose.msra.mxu0 0.0
    %187 = vmatprep.subr.mxu0 0.0
    %188 = vmatpush1.xpose.msra.mxu0 0.0
    %189 = vmatprep.subr.mxu0 0.0
    %190 = vmatpush1.xpose.msra.mxu0 0.0
    %191 = vmatprep.subr.mxu0 0.0
    %192 = vmatpush1.xpose.msra.mxu0 0.0
    %193 = vmatprep.subr.mxu0 0.0
    %194 = vmatpush1.xpose.msra.mxu0 0.0
    %195 = vmatprep.subr.mxu0 0.0
    %196 = vmatpush1.xpose.msra.mxu0 0.0
    %197 = vmatprep.subr.mxu0 0.0
    %198 = vmatpush1.xpose.msra.mxu0 0.0
    %199 = vmatprep.subr.mxu0 0.0
    %200 = vmatpush1.xpose.msra.mxu0 0.0
    %201 = vmatprep.mubr.f32.mxu0 0.0
    %202 = vmatmul.mubr.f32.gmra.mrb[0].mxu0 %v65
    %v203 = vpop.f32.mrb[0].mxu0
    %v204 = vadd.f32 0.0, %v203
    %v205 = vpop.f32.mrb[0].mxu0
    %206 = vdwg.mxu0
    %207 = vmatprep.subr.mxu0 0.0
    %208 = vmatpush1.xpose.msra.mxu0 %v64
    %209 = vmatprep.subr.mxu0 0.0
    %210 = vmatpush1.xpose.msra.mxu0 0.0
    %211 = vmatprep.subr.mxu0 0.0
    %212 = vmatpush1.xpose.msra.mxu0 0.0
    %213 = vmatprep.subr.mxu0 0.0
    %214 = vmatpush1.xpose.msra.mxu0 0.0
    %215 = vmatprep.subr.mxu0 0.0
    %216 = vmatpush1.xpose.msra.mxu0 0.0
    %217 = vmatprep.subr.mxu0 0.0
    %218 = vmatpush1.xpose.msra.mxu0 0.0
    %219 = vmatprep.subr.mxu0 0.0
    %220 = vmatpush1.xpose.msra.mxu0 0.0
    %221 = vmatprep.subr.mxu0 0.0
    %222 = vmatpush1.xpose.msra.mxu0 0.0
    %223 = vmatprep.subr.mxu0 0.0
    %224 = vmatpush1.xpose.msra.mxu0 0.0
    %225 = vmatprep.subr.mxu0 0.0
    %226 = vmatpush1.xpose.msra.mxu0 0.0
    %227 = vmatprep.subr.mxu0 0.0
    %228 = vmatpush1.xpose.msra.mxu0 0.0
    %229 = vmatprep.subr.mxu0 0.0
    %230 = vmatpush1.xpose.msra.mxu0 0.0
    %231 = vmatprep.subr.mxu0 0.0
    %232 = vmatpush1.xpose.msra.mxu0 0.0
    %233 = vmatprep.subr.mxu0 0.0
    %234 = vmatpush1.xpose.msra.mxu0 0.0
    %235 = vmatprep.subr.mxu0 0.0
    %236 = vmatpush1.xpose.msra.mxu0 0.0
    %237 = vmatprep.subr.mxu0 0.0
    %238 = vmatpush1.xpose.msra.mxu0 0.0
    %239 = vmatprep.subr.mxu0 0.0
    %240 = vmatpush1.xpose.msra.mxu0 0.0
    %241 = vmatprep.subr.mxu0 0.0
    %242 = vmatpush1.xpose.msra.mxu0 0.0
    %243 = vmatprep.subr.mxu0 0.0
    %244 = vmatpush1.xpose.msra.mxu0 0.0
    %245 = vmatprep.subr.mxu0 0.0
    %246 = vmatpush1.xpose.msra.mxu0 0.0
    %247 = vmatprep.subr.mxu0 0.0
    %248 = vmatpush1.xpose.msra.mxu0 0.0
    %249 = vmatprep.subr.mxu0 0.0
    %250 = vmatpush1.xpose.msra.mxu0 0.0
    %251 = vmatprep.subr.mxu0 0.0
    %252 = vmatpush1.xpose.msra.mxu0 0.0
    %253 = vmatprep.subr.mxu0 0.0
    %254 = vmatpush1.xpose.msra.mxu0 0.0
    %255 = vmatprep.subr.mxu0 0.0
    %256 = vmatpush1.xpose.msra.mxu0 0.0
    %257 = vmatprep.subr.mxu0 0.0
    %258 = vmatpush1.xpose.msra.mxu0 0.0
    %259 = vmatprep.subr.mxu0 0.0
    %260 = vmatpush1.xpose.msra.mxu0 0.0
    %261 = vmatprep.subr.mxu0 0.0
    %262 = vmatpush1.xpose.msra.mxu0 0.0
    %263 = vmatprep.subr.mxu0 0.0
    %264 = vmatpush1.xpose.msra.mxu0 0.0
    %265 = vmatprep.subr.mxu0 0.0
    %266 = vmatpush1.xpose.msra.mxu0 0.0
    %267 = vmatprep.subr.mxu0 0.0
    %268 = vmatpush1.xpose.msra.mxu0 0.0
    %269 = vmatprep.subr.mxu0 0.0
    %270 = vmatpush1.xpose.msra.mxu0 0.0
    %271 = vmatprep.mubr.f32.mxu0 0.0
    %272 = vmatmul.mubr.f32.gmra.mrb[0].mxu0 %v66
    %v273 = vpop.f32.mrb[0].mxu0
    %v274 = vadd.f32 0.0, %v273
    %v275 = vpop.f32.mrb[0].mxu0
    %276 = vdwg.mxu0
    %277 = vmatprep.subr.mxu0 0.0
    %278 = vmatpush1.xpose.msra.mxu0 %v63
    %279 = vmatprep.subr.mxu0 0.0
    %280 = vmatpush1.xpose.msra.mxu0 0.0
    %281 = vmatprep.subr.mxu0 0.0
    %282 = vmatpush1.xpose.msra.mxu0 0.0
    %283 = vmatprep.subr.mxu0 0.0
    %284 = vmatpush1.xpose.msra.mxu0 0.0
    %285 = vmatprep.subr.mxu0 0.0
    %286 = vmatpush1.xpose.msra.mxu0 0.0
    %287 = vmatprep.subr.mxu0 0.0
    %288 = vmatpush1.xpose.msra.mxu0 0.0
    %289 = vmatprep.subr.mxu0 0.0
    %290 = vmatpush1.xpose.msra.mxu0 0.0
    %291 = vmatprep.subr.mxu0 0.0
    %292 = vmatpush1.xpose.msra.mxu0 0.0
    %293 = vmatprep.subr.mxu0 0.0
    %294 = vmatpush1.xpose.msra.mxu0 0.0
    %295 = vmatprep.subr.mxu0 0.0
    %296 = vmatpush1.xpose.msra.mxu0 0.0
    %297 = vmatprep.subr.mxu0 0.0
    %298 = vmatpush1.xpose.msra.mxu0 0.0
    %299 = vmatprep.subr.mxu0 0.0
    %300 = vmatpush1.xpose.msra.mxu0 0.0
    %301 = vmatprep.subr.mxu0 0.0
    %302 = vmatpush1.xpose.msra.mxu0 0.0
    %303 = vmatprep.subr.mxu0 0.0
    %304 = vmatpush1.xpose.msra.mxu0 0.0
    %305 = vmatprep.subr.mxu0 0.0
    %306 = vmatpush1.xpose.msra.mxu0 0.0
    %307 = vmatprep.subr.mxu0 0.0
    %308 = vmatpush1.xpose.msra.mxu0 0.0
    %309 = vmatprep.subr.mxu0 0.0
    %310 = vmatpush1.xpose.msra.mxu0 0.0
    %311 = vmatprep.subr.mxu0 0.0
    %312 = vmatpush1.xpose.msra.mxu0 0.0
    %313 = vmatprep.subr.mxu0 0.0
    %314 = vmatpush1.xpose.msra.mxu0 0.0
    %315 = vmatprep.subr.mxu0 0.0
    %316 = vmatpush1.xpose.msra.mxu0 0.0
    %317 = vmatprep.subr.mxu0 0.0
    %318 = vmatpush1.xpose.msra.mxu0 0.0
    %319 = vmatprep.subr.mxu0 0.0
    %320 = vmatpush1.xpose.msra.mxu0 0.0
    %321 = vmatprep.subr.mxu0 0.0
    %322 = vmatpush1.xpose.msra.mxu0 0.0
    %323 = vmatprep.subr.mxu0 0.0
    %324 = vmatpush1.xpose.msra.mxu0 0.0
    %325 = vmatprep.subr.mxu0 0.0
    %326 = vmatpush1.xpose.msra.mxu0 0.0
    %327 = vmatprep.subr.mxu0 0.0
    %328 = vmatpush1.xpose.msra.mxu0 0.0
    %329 = vmatprep.subr.mxu0 0.0
    %330 = vmatpush1.xpose.msra.mxu0 0.0
    %331 = vmatprep.subr.mxu0 0.0
    %332 = vmatpush1.xpose.msra.mxu0 0.0
    %333 = vmatprep.subr.mxu0 0.0
    %334 = vmatpush1.xpose.msra.mxu0 0.0
    %335 = vmatprep.subr.mxu0 0.0
    %336 = vmatpush1.xpose.msra.mxu0 0.0
    %337 = vmatprep.subr.mxu0 0.0
    %338 = vmatpush1.xpose.msra.mxu0 0.0
    %339 = vmatprep.subr.mxu0 0.0
    %340 = vmatpush1.xpose.msra.mxu0 0.0
    %341 = vmatprep.mubr.f32.mxu0 0.0
    %342 = vmatmul.mubr.f32.gmra.mrb[0].mxu0 %v66
    %v343 = vpop.f32.mrb[0].mxu0
    %v344 = vadd.f32 0.0, %v343
    %v345 = vpop.f32.mrb[0].mxu0
    %346 = vdwg.mxu0
    %s347 = smul.u32 0, 8
    %v348 = vlaneseq
    %v349 = vshrl.u32 %v348, 7
    %v350 = vstv %s347
    %v351 = vadd.s32 %v350, %v349
    %s352 = smul.u32 0, 8
    %v353 = vlaneseq
    %v354 = vand.u32 %v353, 127
    %v355 = vstv %s352
    %v356 = vadd.s32 %v355, %v354
    %vm357 = vcmp.lt.s32.totalorder %v356, 8
    %vm358 = vcmp.ne.s32.totalorder %v351, %v356
    %v359 = vsel %vm357, %v134, -inf
    %v360 = vsel %vm357, %v344, -inf
    %vm361 = vmand %vm357, %vm358
    %v362 = vsel %vm361, %v204, -inf
    %v363 = vsel %vm361, %v274, -inf
    %vm364 = vcmask 64512
    %v365 = vsel %vm364, %v359, -inf
    %366 = vmax.xlane.f32.xlu0 %v365
    %v367 = vpop.xlane.xlu0 %366
    %v368 = vsel %vm364, %v362, -inf
    %369 = vmax.xlane.f32.xlu0 %v368
    %v370 = vpop.xlane.xlu0 %369
    %v371 = vmax.f32 %v367, %v370
    %v372 = vld [vmem:[#allocation2] sm:$0xff]
    %v373 = vmax.f32 %v372, %v371
    %v374 = vsub.f32 %v372, %v373
    %v375 = vmul.f32 %v374, 1.442695
    %v376 = vpow.pop %v375
    %378 = vset.pattern.permute.xlu0 0
    %379 = vperm.xlu0 %378, %v373
    %v380 = vpop.permute.xlu0 %379
    %v382 = vsub.f32 %v359, %v380
    %v383 = vmul.f32 %v382, 1.442695
    %v384 = vpow.pop %v383
    %v385 = vsel %vm364, %v384, 0.0
    %386 = vadd.xlane.f32.xlu0 %v385
    %v387 = vpop.xlane.xlu0 %386
    %v388 = vsub.f32 %v362, %v380
    %v389 = vmul.f32 %v388, 1.442695
    %v390 = vpow.pop %v389
    %v391 = vsel %vm364, %v390, 0.0
    %392 = vadd.xlane.f32.xlu0 %v391
    %v393 = vpop.xlane.xlu0 %392
    %v394 = vadd.f32 %v387, %v393
    %v395 = vld [vmem:[#allocation3] sm:$0xff]
    %v396 = vmul.f32 %v376, %v395
    %v397 = vadd.f32 %v396, %v394
    %vm398 = vcmask 7168
    %399 = vst.msk [vmem:[#allocation3] sm:$0xff] %vm398, %v397
    %400 = vst.msk [vmem:[#allocation2] sm:$0xff] %vm398, %v373
    %v401 = vsel %vm364, %v363, -inf
    %402 = vmax.xlane.f32.xlu0 %v401
    %v403 = vpop.xlane.xlu0 %402
    %v404 = vsel %vm364, %v360, -inf
    %405 = vmax.xlane.f32.xlu0 %v404
    %v406 = vpop.xlane.xlu0 %405
    %v407 = vmax.f32 %v403, %v406
    %v408 = vld [vmem:[#allocation4] sm:$0xff]
    %v409 = vmax.f32 %v408, %v407
    %v410 = vsub.f32 %v408, %v409
    %v411 = vmul.f32 %v410, 1.442695
    %v412 = vpow.pop %v411
    %414 = vset.pattern.permute.xlu0 0
    %415 = vperm.xlu0 %414, %v409
    %v416 = vpop.permute.xlu0 %415
    %v418 = vsub.f32 %v363, %v416
    %v419 = vmul.f32 %v418, 1.442695
    %v420 = vpow.pop %v419
    %v421 = vsel %vm364, %v420, 0.0
    %422 = vadd.xlane.f32.xlu0 %v421
    %v423 = vpop.xlane.xlu0 %422
    %v424 = vsub.f32 %v360, %v416
    %v425 = vmul.f32 %v424, 1.442695
    %v426 = vpow.pop %v425
    %v427 = vsel %vm364, %v426, 0.0
    %428 = vadd.xlane.f32.xlu0 %v427
    %v429 = vpop.xlane.xlu0 %428
    %v430 = vadd.f32 %v423, %v429
    %v431 = vld [vmem:[#allocation5] sm:$0xff]
    %v432 = vmul.f32 %v412, %v431
    %v433 = vadd.f32 %v432, %v430
    %434 = vst.msk [vmem:[#allocation5] sm:$0xff] %vm398, %v433
    %435 = vst.msk [vmem:[#allocation4] sm:$0xff] %vm398, %v409
    // Predicated region
    $region34: #{tpu_custom_call.1} parent=1 // pred_check
      %p436 = pneg %p52
    $region35: #{tpu_custom_call.1} parent=1 // pred_check_branch
      %438 = sbr.rel (%p436) target = $region37
    $region36: #{tpu_custom_call.1} parent=1 // pred_region
      %v439 = vmul.f32 %v65, %v62
      %440 = vadd.xlane.f32.xlu0 %v439
      %v441 = vpop.xlane.xlu0 %440
      %v442 = vld [vmem:[#allocation2] sm:$0xff]
      %v443 = vld [vmem:[#allocation3] sm:$0xff]
      %v444 = vlog2.pop %v443
      %v445 = vmul.f32 %v444, 0.6931472
      %v446 = vadd.f32 %v442, %v445
      %v447 = vld [vmem:[#allocation4] sm:$0xff]
      %v448 = vld [vmem:[#allocation5] sm:$0xff]
      %v449 = vlog2.pop %v448
      %v450 = vmul.f32 %v449, 0.6931472
      %v451 = vadd.f32 %v447, %v450
      %vm452 = vcmp.lt.s32.totalorder %v351, 8
      %v453 = vadd.f32 %v446, %v451
      %v454 = vmul.f32 %v441, 2.0
      %v455 = vsub.f32 %v453, %v454
      %v456 = vsel %vm452, %v455, 0.0
      %457 = vst.msk [vmem:[%s4] sm:$0xff] %vm398, %v456
    $region37: #{tpu_custom_call.1} parent=1 // pred_fallthru
      _
    // Predicated region
    $region38: #{tpu_custom_call.1} parent=1 // pred_check
      _
    $region39: #{tpu_custom_call.1} parent=1 // pred_check_branch
      %459 = sbr.rel (0) target = $region41
    $region40: #{tpu_custom_call.1} parent=1 // pred_region
      _
    $region41: #{tpu_custom_call.1} parent=1 // pred_fallthru
      _
    // Predicated region
    $region42: #{tpu_custom_call.1} parent=1 // pred_check
      _
    $region43: #{tpu_custom_call.1} parent=1 // pred_check_branch
      %461 = sbr.rel (0) target = $region45
    $region44: #{tpu_custom_call.1} parent=1 // pred_region
      _
    $region45: #{tpu_custom_call.1} parent=1 // pred_fallthru
      _
    %462 = vsyncpa [#allocation7], 1
    %463 = vsyncpa [#allocation9], 1

</llo_original>
